<compile_context>
chip_gen: v5e
topology: v5e:2x2
jax: 0.10.0
libtpu: 0.0.40
codegen_flags: <defaults>
</compile_context>

<pallas_src>
import functools

import jax
import jax.numpy as jnp
from jax.experimental import pallas as pl
from jax.experimental.pallas import tpu as pltpu


def _focal_loss_kernel(x_ref, t_ref, a_ref, out_ref, *,
                       gamma, n_total, tile_n, tiles_per_slice):
    """Processes one (tile_n, C) row tile; accumulates sum(batch_loss) into out_ref."""
    p = pl.program_id(0)          # parallel row-slice (megacore axis)
    i = pl.program_id(1)          # reduction step within the slice

    # Each parallel slice owns its own (1, 1, 1) output block; initialize it on
    # the slice's first step and accumulate in place (block stays resident
    # across the inner 'arbitrary' axis).
    @pl.when(i == 0)
    def _init():
        out_ref[...] = jnp.zeros_like(out_ref)

    x = x_ref[...].astype(jnp.float32)          # (T, C) logits tile
    t = t_ref[...]                              # (T, 1) int32 targets tile
    a = a_ref[...].astype(jnp.float32)          # (1, C) alpha row-vector

    tn, c = x.shape

    # --- log-softmax pieces (no full (T, C) divide) --------------------------
    m = jnp.max(x, axis=-1, keepdims=True)                       # (T, 1)
    sum_e = jnp.sum(jnp.exp(x - m), axis=-1, keepdims=True)      # (T, 1)

    # one-hot class mask via iota compare (== scatter_(1, ids, 1.0)).
    # Note: out-of-range targets (t < 0 or t >= C) select nothing and
    # contribute 0 to the loss (the PyTorch reference would error instead).
    col = jax.lax.broadcasted_iota(jnp.int32, (tn, c), 1)
    onehot = col == t                                            # (T, C) bool

    # logit at the target class and alpha[target] via masked lane reductions
    x_t = jnp.sum(jnp.where(onehot, x, 0.0), axis=-1, keepdims=True)      # (T, 1)
    alpha_g = jnp.sum(jnp.where(onehot, a, 0.0), axis=-1, keepdims=True)  # (T, 1)

    log_p = (x_t - m) - jnp.log(sum_e)          # log softmax at the target class
    probs = jnp.exp(log_p)                      # softmax prob at the target class
    one_minus_p = 1.0 - probs

    # --- focal modulation (1 - p)^gamma --------------------------------------
    # Integer gamma stays on the VPU multiply chain so the single EUP slot is
    # reserved for the exp(x - m) pass — do not regress to jnp.power.
    g = float(gamma)
    if g == 2.0:
        mod = one_minus_p * one_minus_p                         # one VPU mul
    elif g == float(int(g)) and 0 <= int(g) <= 8:
        mod = jnp.ones_like(one_minus_p)
        for _ in range(int(g)):
            mod = mod * one_minus_p
    else:
        mod = jnp.power(one_minus_p, g)                         # EUP log+exp path

    batch_loss = -alpha_g * mod * log_p                         # (T, 1)

    # Mask rows past the true batch size (partial last tile, and any clamped /
    # duplicated tile when the parallel split over-covers the tile range).
    # Keep this as a NaN-safe select — padded rows may hold inf/NaN after
    # exp/log; a multiplicative 0/1 mask would propagate NaN.
    tile_idx = p * tiles_per_slice + i
    row = tile_idx * tile_n + jax.lax.broadcasted_iota(jnp.int32, (tn, 1), 0)
    batch_loss = jnp.where(row < n_total, batch_loss, 0.0)

    tile_sum = jnp.sum(batch_loss, axis=0, keepdims=True)        # (1, 1)
    out_ref[...] += tile_sum.reshape(1, 1, 1)


def _plan_tiles(n, c):
    """Row-tile size / grid plan from a generation-aware VMEM budget."""
    try:
        phys_vmem = int(pltpu.get_tpu_info().vmem_capacity_bytes)
    except Exception:
        phys_vmem = 32 * 1024 * 1024        # conservative fallback
    # v5e/v6e (128 MiB physical): 24 MiB working budget, scoped limit 64 MiB.
    # v7x (64 MiB physical):      16 MiB working budget, scoped limit 32 MiB.
    budget = min(24 * 1024 * 1024, phys_vmem // 4)
    vmem_limit = min(64 * 1024 * 1024, phys_vmem // 2)

    c_pad = ((c + 127) // 128) * 128
    # Per-row footprint: 2x double-buffered lane-padded logits block,
    # ~4 live lane-padded f32 (T, C) temporaries (exp(x-m), one-hot, 2x where),
    # plus the (T, 1) targets block lane-padded to 128 lanes (x2 buffers).
    bytes_per_row = 4 * (2 * c_pad + 4 * c_pad + 2 * 128)

    tile = int(budget // bytes_per_row)
    if tile >= n:
        tile = n                              # single full-extent block
    else:
        tile = max(16, (tile // 16) * 16)     # multiple of 16: f32 & bf16 sublanes

    num_tiles = pl.cdiv(n, tile)

    # Megacore: split the rows over a 2-way "parallel" axis so v7x's second
    # TensorCore gets half the work.  Harmless on 1-TC chips (at most one extra
    # large grid step); skipped for tiny batches where a single step wins.
    num_slices = 1
    if n >= 1024:
        num_slices = 2
        if num_tiles < num_slices:
            tile = max(16, ((pl.cdiv(n, 2) + 15) // 16) * 16)
            num_tiles = pl.cdiv(n, tile)
    tiles_per_slice = pl.cdiv(num_tiles, num_slices)

    return tile, num_tiles, num_slices, tiles_per_slice, vmem_limit


def focal_loss(inputs, targets, alpha, gamma=2.0):
    """inputs: (N, C) float (f32 or bf16); targets: (N,) int; alpha: (C,) or (C, 1)."""
    n, c = inputs.shape
    t2 = targets.reshape(n, 1).astype(jnp.int32)
    a2 = alpha.reshape(1, c).astype(jnp.float32)

    tile_n, num_tiles, num_slices, tiles_per_slice, vmem_limit = _plan_tiles(n, c)

    # Row-block index for (slice p, step i).  When the parallel split
    # over-covers the tile range (odd tile count), clamp to the last real tile
    # so no DMA goes fully out of bounds; the in-kernel row mask zeroes the
    # duplicated tile's contribution.
    overcovered = num_slices * tiles_per_slice > num_tiles

    def row_block(p, i):
        idx = p * tiles_per_slice + i
        if overcovered:
            idx = jnp.minimum(idx, num_tiles - 1)
        return idx

    kernel = functools.partial(
        _focal_loss_kernel, gamma=float(gamma), n_total=n,
        tile_n=tile_n, tiles_per_slice=tiles_per_slice)

    partial_sums = pl.pallas_call(
        kernel,
        out_shape=jax.ShapeDtypeStruct((num_slices, 1, 1), jnp.float32),
        grid_spec=pltpu.PrefetchScalarGridSpec(
            num_scalar_prefetch=0,
            grid=(num_slices, tiles_per_slice),
            in_specs=[
                pl.BlockSpec((tile_n, c), lambda p, i: (row_block(p, i), 0)),  # logits
                pl.BlockSpec((tile_n, 1), lambda p, i: (row_block(p, i), 0)),  # targets
                pl.BlockSpec((1, c), lambda p, i: (0, 0)),                     # alpha (resident)
            ],
            out_specs=pl.BlockSpec((1, 1, 1), lambda p, i: (p, 0, 0)),  # per-slice partial sum
        ),
        compiler_params=pltpu.CompilerParams(
            dimension_semantics=("parallel", "arbitrary"),
            vmem_limit_bytes=vmem_limit,
        ),
    )(inputs, t2, a2)

    # size_average=True, global_weight=None -> mean over the true batch size.
    return jnp.sum(partial_sums) / jnp.float32(n)


def _focal_loss_ref(inputs, targets, alpha, gamma=2.0):
    p = jax.nn.softmax(inputs.astype(jnp.float32), axis=-1)
    mask = jax.nn.one_hot(targets, inputs.shape[1], dtype=jnp.float32)
    probs = jnp.sum(p * mask, axis=1, keepdims=True)
    alpha_g = alpha.reshape(-1)[targets].reshape(-1, 1).astype(jnp.float32)
    batch_loss = -alpha_g * jnp.power(1.0 - probs, gamma) * jnp.log(probs)
    return jnp.mean(batch_loss)


if __name__ == "__main__":
    key = jax.random.PRNGKey(0)
    k1, k2, k3, k4, k5 = jax.random.split(key, 5)

    # --- Test 1: module-default small case (alpha = ones, gamma = 2) --------
    class_num = 16   # C
    batch = 8        # N
    inputs = jax.random.normal(k1, (batch, class_num), dtype=jnp.float32)
    targets = jax.random.randint(k2, (batch,), 0, class_num, dtype=jnp.int32)
    alpha = jnp.ones((class_num, 1), dtype=jnp.float32)   # alpha=None in the module

    loss = jax.block_until_ready(focal_loss(inputs, targets, alpha, gamma=2.0))
    ref = _focal_loss_ref(inputs, targets, alpha, gamma=2.0)
    assert jnp.allclose(loss, ref, rtol=1e-4, atol=1e-6), (loss, ref)

    # --- Test 2: multi-slice / partial-tile path (GroupFree3D-like C=18) ----
    c2, n2 = 18, 2304
    inputs2 = 2.0 * jax.random.normal(k3, (n2, c2), dtype=jnp.float32)
    targets2 = jax.random.randint(k4, (n2,), 0, c2, dtype=jnp.int32)
    alpha2 = jax.random.uniform(k5, (c2, 1), jnp.float32, 0.5, 1.5)

    loss2 = jax.block_until_ready(focal_loss(inputs2, targets2, alpha2, gamma=2.0))
    ref2 = _focal_loss_ref(inputs2, targets2, alpha2, gamma=2.0)
    assert jnp.allclose(loss2, ref2, rtol=1e-4, atol=1e-5), (loss2, ref2)

    print("KERNEL_OK")
</pallas_src>

<mosaic_0001>
module attributes {stable_mosaic.version = 11 : i64} {
  func.func @_focal_loss_kernel(%arg0: i32, %arg1: i32, %arg2: memref<8x16xf32, #tpu.memory_space<vmem>>, %arg3: memref<8x1xi32, #tpu.memory_space<vmem>>, %arg4: memref<1x16xf32, #tpu.memory_space<vmem>>, %arg5: memref<1x1x1xf32, #tpu.memory_space<vmem>>) attributes {dimension_semantics = [#tpu.dimension_semantics<parallel>, #tpu.dimension_semantics<arbitrary>], iteration_bounds = array<i64: 1, 1>, scalar_prefetch = 0 : i64, scratch_operands = 0 : i64, tpu.core_type = #tpu.core_type<tc>, window_params = [{transform_indices = @transform_0, window_bounds = array<i64: 8, 16>}, {transform_indices = @transform_1, window_bounds = array<i64: 8, 1>}, {pipeline_mode = #tpu.pipeline_mode<synchronous>, transform_indices = @transform_2, window_bounds = array<i64: 1, 16>}, {transform_indices = @transform_3, window_bounds = array<i64: 1, 1, 1>}]} {
    %c0_i32 = arith.constant 0 : i32
    %0 = arith.cmpi eq, %arg1, %c0_i32 : i32
    %1 = arith.extui %0 : i1 to i32
    %c0_i32_0 = arith.constant 0 : i32
    %2 = arith.cmpi ne, %1, %c0_i32_0 : i32
    scf.if %2 {
      %cst_22 = arith.constant 0.000000e+00 : f32
      %53 = vector.broadcast %cst_22 : f32 to vector<1x1x1xf32>
      %c0_23 = arith.constant 0 : index
      %c0_24 = arith.constant 0 : index
      %c0_25 = arith.constant 0 : index
      %54 = vector.load %arg5[%c0_23, %c0_24, %c0_25] : memref<1x1x1xf32, #tpu.memory_space<vmem>>, vector<1x1x1xf32>
      tpu.vector_store %arg5[%c0_23, %c0_24, %c0_25], %53 {strides = array<i32>} : memref<1x1x1xf32, #tpu.memory_space<vmem>>, vector<1x1x1xf32>,
    } else {
    }
    %c0 = arith.constant 0 : index
    %c0_1 = arith.constant 0 : index
    %3 = vector.load %arg2[%c0, %c0_1] : memref<8x16xf32, #tpu.memory_space<vmem>>, vector<8x16xf32>
    %c0_2 = arith.constant 0 : index
    %c0_3 = arith.constant 0 : index
    %4 = vector.load %arg3[%c0_2, %c0_3] : memref<8x1xi32, #tpu.memory_space<vmem>>, vector<8x1xi32>
    %c0_4 = arith.constant 0 : index
    %c0_5 = arith.constant 0 : index
    %5 = vector.load %arg4[%c0_4, %c0_5] : memref<1x16xf32, #tpu.memory_space<vmem>>, vector<1x16xf32>
    %cst = arith.constant dense<0xFF800000> : vector<8xf32>
    %6 = vector.multi_reduction <maximumf>, %3, %cst [1] : vector<8x16xf32> to vector<8xf32>
    %7 = vector.shape_cast %6 : vector<8xf32> to vector<8x1xf32>
    %8 = vector.broadcast %7 : vector<8x1xf32> to vector<8x16xf32>
    %9 = arith.subf %3, %8 : vector<8x16xf32>
    %10 = math.exp %9 : vector<8x16xf32>
    %cst_6 = arith.constant dense<0.000000e+00> : vector<8xf32>
    %11 = vector.multi_reduction <add>, %10, %cst_6 [1] : vector<8x16xf32> to vector<8xf32>
    %12 = vector.shape_cast %11 : vector<8xf32> to vector<8x1xf32>
    %13 = tpu.iota {dimensions = array<i32: 1>} : vector<8x16xi32>
    %14 = vector.broadcast %4 : vector<8x1xi32> to vector<8x16xi32>
    %15 = arith.cmpi eq, %13, %14 : vector<8x16xi32>
    %cst_7 = arith.constant 0.000000e+00 : f32
    %16 = vector.broadcast %cst_7 : f32 to vector<8x16xf32>
    %17 = arith.select %15, %3, %16 : vector<8x16xi1>, vector<8x16xf32>
    %cst_8 = arith.constant dense<0.000000e+00> : vector<8xf32>
    %18 = vector.multi_reduction <add>, %17, %cst_8 [1] : vector<8x16xf32> to vector<8xf32>
    %19 = vector.shape_cast %18 : vector<8xf32> to vector<8x1xf32>
    %cst_9 = arith.constant 0.000000e+00 : f32
    %20 = vector.shape_cast %5 : vector<1x16xf32> to vector<1x16xf32>
    %21 = vector.broadcast %20 : vector<1x16xf32> to vector<8x16xf32>
    %22 = vector.broadcast %cst_9 : f32 to vector<8x16xf32>
    %23 = arith.select %15, %21, %22 : vector<8x16xi1>, vector<8x16xf32>
    %cst_10 = arith.constant dense<0.000000e+00> : vector<8xf32>
    %24 = vector.multi_reduction <add>, %23, %cst_10 [1] : vector<8x16xf32> to vector<8xf32>
    %25 = vector.shape_cast %24 : vector<8xf32> to vector<8x1xf32>
    %26 = arith.subf %19, %7 : vector<8x1xf32>
    %27 = math.log %12 : vector<8x1xf32>
    %28 = arith.subf %26, %27 : vector<8x1xf32>
    %29 = math.exp %28 : vector<8x1xf32>
    %cst_11 = arith.constant 1.000000e+00 : f32
    %30 = vector.broadcast %cst_11 : f32 to vector<8x1xf32>
    %31 = arith.subf %30, %29 : vector<8x1xf32>
    %32 = arith.mulf %31, %31 : vector<8x1xf32>
    %cst_12 = arith.constant 0.000000e+00 : f32
    %33 = vector.broadcast %cst_12 : f32 to vector<8x1xf32>
    %34 = arith.subf %33, %25 : vector<8x1xf32>
    %35 = arith.mulf %34, %32 : vector<8x1xf32>
    %36 = arith.mulf %35, %28 : vector<8x1xf32>
    %c1_i32 = arith.constant 1 : i32
    %37 = arith.muli %arg0, %c1_i32 : i32
    %38 = arith.addi %37, %arg1 : i32
    %c8_i32 = arith.constant 8 : i32
    %39 = arith.muli %38, %c8_i32 : i32
    %40 = tpu.iota {dimensions = array<i32: 0>} : vector<8x1xi32>
    %41 = vector.broadcast %39 : i32 to vector<8x1xi32>
    %42 = arith.addi %41, %40 : vector<8x1xi32>
    %c8_i32_13 = arith.constant 8 : i32
    %43 = vector.broadcast %c8_i32_13 : i32 to vector<8x1xi32>
    %44 = arith.cmpi slt, %42, %43 : vector<8x1xi32>
    %cst_14 = arith.constant 0.000000e+00 : f32
    %45 = vector.broadcast %cst_14 : f32 to vector<8x1xf32>
    %46 = arith.select %44, %36, %45 : vector<8x1xi1>, vector<8x1xf32>
    %cst_15 = arith.constant dense<0.000000e+00> : vector<1xf32>
    %47 = vector.multi_reduction <add>, %46, %cst_15 [0] : vector<8x1xf32> to vector<1xf32>
    %48 = vector.shape_cast %47 : vector<1xf32> to vector<1x1xf32>
    %c0_16 = arith.constant 0 : index
    %c0_17 = arith.constant 0 : index
    %c0_18 = arith.constant 0 : index
    %49 = vector.load %arg5[%c0_16, %c0_17, %c0_18] : memref<1x1x1xf32, #tpu.memory_space<vmem>>, vector<1x1x1xf32>
    %50 = vector.shape_cast %48 : vector<1x1xf32> to vector<1x1x1xf32>
    %51 = arith.addf %49, %50 : vector<1x1x1xf32>
    %c0_19 = arith.constant 0 : index
    %c0_20 = arith.constant 0 : index
    %c0_21 = arith.constant 0 : index
    %52 = vector.load %arg5[%c0_19, %c0_20, %c0_21] : memref<1x1x1xf32, #tpu.memory_space<vmem>>, vector<1x1x1xf32>
    tpu.vector_store %arg5[%c0_19, %c0_20, %c0_21], %51 {strides = array<i32>} : memref<1x1x1xf32, #tpu.memory_space<vmem>>, vector<1x1x1xf32>,
    return
  }
  func.func @transform_0(%arg0: i32, %arg1: i32) -> (i32, i32) {
    %c1_i32 = arith.constant 1 : i32
    %0 = arith.muli %arg0, %c1_i32 : i32
    %1 = arith.addi %0, %arg1 : i32
    %c0_i32 = arith.constant 0 : i32
    %c0_i32_0 = arith.constant 0 : i32
    return %1, %c0_i32 : i32, i32
  }
  func.func @transform_1(%arg0: i32, %arg1: i32) -> (i32, i32) {
    %c1_i32 = arith.constant 1 : i32
    %0 = arith.muli %arg0, %c1_i32 : i32
    %1 = arith.addi %0, %arg1 : i32
    %c0_i32 = arith.constant 0 : i32
    %c0_i32_0 = arith.constant 0 : i32
    return %1, %c0_i32 : i32, i32
  }
  func.func @transform_2(%arg0: i32, %arg1: i32) -> (i32, i32) {
    %c0_i32 = arith.constant 0 : i32
    %c0_i32_0 = arith.constant 0 : i32
    %c0_i32_1 = arith.constant 0 : i32
    return %c0_i32, %c0_i32_0 : i32, i32
  }
  func.func @transform_3(%arg0: i32, %arg1: i32) -> (i32, i32, i32) {
    %c0_i32 = arith.constant 0 : i32
    %c0_i32_0 = arith.constant 0 : i32
    %c0_i32_1 = arith.constant 0 : i32
    return %arg0, %c0_i32, %c0_i32_0 : i32, i32, i32
  }
}

</mosaic_0001>

<llo_original>
// kernel: tpu_custom_call.1
$region0: #{tpu_custom_call.1}
  #allocation0 [shape = 'u32[]', space=smem, size = 0x4, offset = 0x4, fixed_abs, tag = 'smem constant byte address 0x4 - core index']
  #allocation1 [shape = 'u32[72,128]{1,0:T(1,128)}', space=vmem, size = 0x9000, scoped, tag = 'internal scratch']
  %s0 = inlined_call_operand.vmem [shape: f32[8,16], index: 0, kind: input, shape index: {}]
  %s1 = inlined_call_operand.vmem [shape: s32[8,1], index: 1, kind: input, shape index: {}]
  %s2 = inlined_call_operand.vmem [shape: f32[1,16], index: 2, kind: input, shape index: {}]
  %s3 = inlined_call_operand.hbm [shape: f32[1,1,1], index: 3, kind: output, shape index: {}]
  %s4 = sld [smem:[#allocation0]]
  $region26: #{tpu_custom_call.1} parent=0
    _
  %s6 = ssub.s32 1, %s4
  %s7 = scalar_select 0, %s6, %s4
  $region1: #{tpu_custom_call.1} parent=0
    #allocation2 [shape = 'u8[512]{0}', space=vmem, size = 0x400, scoped, tag = 'output window, operand 0, single buffered']
    #allocation3 [shape = 's32[1]{0}', space=sflag, size = 0x4, scoped, tag = 'scoped memory for tpu_custom_call.1']
    %8 = vsyncpa [#allocation3], 0
    // Predicated region
    $region2: #{tpu_custom_call.1} parent=1 // pred_check
      _
    $region3: #{tpu_custom_call.1} parent=1 // pred_check_branch
      %10 = sbr.rel (0) target = $region5
    $region4: #{tpu_custom_call.1} parent=1 // pred_region
      %s11 = sadd.s32 0, 0
      %p12 = scmp.lt.s32.totalorder %s11, 0
      %s13 = scalar_select %p12, %s11, 0
      %s14 = smul.addr %s13, 8
      %s15 = scalar_lea.vmem %s0, %s14
      %s16 = sadd.s32 0, 0
    $region5: #{tpu_custom_call.1} parent=1 // pred_fallthru
      _
    // Predicated region
    $region6: #{tpu_custom_call.1} parent=1 // pred_check
      _
    $region7: #{tpu_custom_call.1} parent=1 // pred_check_branch
      %18 = sbr.rel (0) target = $region9
    $region8: #{tpu_custom_call.1} parent=1 // pred_region
      %s19 = sadd.s32 0, 0
      %p20 = scmp.lt.s32.totalorder %s19, 0
      %s21 = scalar_select %p20, %s19, 0
      %s22 = smul.addr %s21, 8
      %s23 = scalar_lea.vmem %s1, %s22
      %s24 = sadd.s32 0, 0
    $region9: #{tpu_custom_call.1} parent=1 // pred_fallthru
      _
    // Predicated region
    $region10: #{tpu_custom_call.1} parent=1 // pred_check
      _
    $region11: #{tpu_custom_call.1} parent=1 // pred_check_branch
      %26 = sbr.rel (0) target = $region13
    $region12: #{tpu_custom_call.1} parent=1 // pred_region
      _
    $region13: #{tpu_custom_call.1} parent=1 // pred_fallthru
      _
    %s27 = sadd.s32 0, 0
    %p28 = scmp.lt.s32.totalorder %s27, 0
    %s29 = scalar_select %p28, %s27, 0
    %s30 = smul.addr %s29, 8
    %s31 = scalar_lea.vmem %s0, %s30
    %s32 = sadd.s32 0, 0
    %p33 = scmp.lt.s32.totalorder %s32, 0
    %s34 = scalar_select %p33, %s32, 0
    %s35 = smul.addr %s34, 8
    %s36 = scalar_lea.vmem %s1, %s35
    %s37 = sadd.s32 0, 0
    %p38 = scmp.lt.s32.totalorder %s37, 0
    %s39 = scalar_select %p38, %s37, 0
    %s40 = smul.addr %s39, 8
    %s41 = scalar_lea.vmem %s0, %s40
    %s42 = sadd.s32 0, 0
    %s43 = sadd.s32 0, 0
    %p44 = scmp.lt.s32.totalorder %s43, 0
    %s45 = scalar_select %p44, %s43, 0
    %s46 = smul.addr %s45, 8
    %s47 = scalar_lea.vmem %s1, %s46
    %s48 = sadd.s32 0, 0
    %p49 = scmp.eq.s32.totalorder 0, 0
    // Predicated region
    $region14: #{tpu_custom_call.1} parent=1 // pred_check
      %p50 = pneg %p49
    $region15: #{tpu_custom_call.1} parent=1 // pred_check_branch
      %52 = sbr.rel (%p50) target = $region17
    $region16: #{tpu_custom_call.1} parent=1 // pred_region
      %vm53 = vcmask 0
      %54 = vst.msk [vmem:[#allocation2] sm:$0x1] %vm53, 0.0
    $region17: #{tpu_custom_call.1} parent=1 // pred_fallthru
      _
    %v55 = vld [vmem:[%s41] sm:$0xff]
    %v56 = vld [vmem:[%s47] sm:$0xff]
    %v57 = vld [vmem:[%s2] sm:$0x1]
    %vm58 = vcmask 130048
    %v59 = vsel %vm58, %v55, -inf
    %60 = vmax.xlane.f32.xlu0 %v59
    %v61 = vpop.xlane.xlu0 %60
    %v62 = vsub.f32 %v55, %v61
    %v63 = vmul.f32 %v62, 1.442695
    %v64 = vpow.pop %v63
    %v65 = vsel %vm58, %v64, 0.0
    %66 = vadd.xlane.f32.xlu0 %v65
    %v67 = vpop.xlane.xlu0 %66
    %v68 = vlaneseq
    %v69 = vand.u32 %v68, 127
    %70 = vset.pattern.permute.xlu0 0
    %71 = vperm.xlu0 %70, %v56
    %v72 = vpop.permute.xlu0 %71
    %vm73 = vcmp.eq.s32.totalorder %v69, %v72
    %v74 = vsel %vm73, %v55, 0.0
    %v75 = vsel %vm58, %v74, 0.0
    %76 = vadd.xlane.f32.xlu0 %v75
    %v77 = vpop.xlane.xlu0 %76
    %v79 = vperm.slane %v57, 0
    %v81 = vsel %vm73, %v79, 0.0
    %v82 = vsel %vm58, %v81, 0.0
    %83 = vadd.xlane.f32.xlu0 %v82
    %v84 = vpop.xlane.xlu0 %83
    %v85 = vsub.f32 %v77, %v61
    %v86 = vlog2.pop %v67
    %v87 = vmul.f32 %v86, 0.6931472
    %v88 = vsub.f32 %v85, %v87
    %v89 = vmul.f32 %v88, 1.442695
    %v90 = vpow.pop %v89
    %v91 = vsub.f32 1.0, %v90
    %v92 = vmul.f32 %v91, %v91
    %v93 = vsub.f32 0.0, %v84
    %v94 = vmul.f32 %v93, %v92
    %v95 = vmul.f32 %v94, %v88
    %s96 = sadd.s32 0, 0
    %s97 = smul.u32 %s96, 8
    %v98 = vlaneseq
    %v99 = vshrl.u32 %v98, 7
    %v100 = vstv %s97
    %v101 = vadd.s32 %v100, %v99
    %vm102 = vcmp.lt.s32.totalorder %v101, 8
    %v103 = vsel %vm102, %v95, 0.0
    %v104 = vrot.slane %v103, 4
    %v105 = vadd.f32 %v103, %v104
    %v106 = vrot.slane %v105, 2
    %v107 = vadd.f32 %v105, %v106
    %v108 = vrot.slane %v107, 1
    %v109 = vadd.f32 %v107, %v108
    %v110 = vld [vmem:[#allocation2] sm:$0x1]
    %v111 = vadd.f32 %v110, %v109
    %vm112 = vcmask 0
    %113 = vst.msk [vmem:[#allocation2] sm:$0x1] %vm112, %v111
    // Predicated region
    $region18: #{tpu_custom_call.1} parent=1 // pred_check
      _
    $region19: #{tpu_custom_call.1} parent=1 // pred_check_branch
      %115 = sbr.rel (0) target = $region21
    $region20: #{tpu_custom_call.1} parent=1 // pred_region
      %117 = vsyncadd [#allocation3], 0
      %s119 = sshll.u32 [#allocation2], 4
      %s120 = int_to_ptr.vmem [resolvable:$true] %s119
      %s121 = sshll.u32 %s3, 4
      %s122 = int_to_ptr.hbm [resolvable:$true] %s121
      %124 = dma.vmem_to_hbm [thread:$0]  %s120, 16, %s122, [#allocation3]
    $region21: #{tpu_custom_call.1} parent=1 // pred_fallthru
      _
    // Predicated region
    $region22: #{tpu_custom_call.1} parent=1 // pred_check
      _
    $region23: #{tpu_custom_call.1} parent=1 // pred_check_branch
      %126 = sbr.rel (0) target = $region25
    $region24: #{tpu_custom_call.1} parent=1 // pred_region
      %128 = dma.done [#allocation3], 16
    $region25: #{tpu_custom_call.1} parent=1 // pred_fallthru
      _
    %129 = vsyncpa [#allocation3], 1

</llo_original>
